<compile_context>
chip_gen: v7x
topology: tpu7x:2x2x1
jax: 0.10.0
libtpu: 0.0.40
codegen_flags: <defaults>
</compile_context>

<pallas_src>
import jax
import jax.numpy as jnp
from jax import lax
from jax.experimental import pallas as pl
from jax.experimental.pallas import tpu as pltpu


def _policy_kernel(x_ref, w1_ref, w2_ref, wh_ref, b12_ref, bh_ref, noise_ref,
                   tau_ref, out_ref):
    """One batch-tile of the PolicyStochastic forward pass (feature-major).

    x_ref    : [TB, D]   observation tile (batch-major input, contracted on D)
    w1_ref   : [H, D]    W1^T   (VMEM-resident across grid, maybe bf16)
    w2_ref   : [H, H]    W2^T
    wh_ref   : [2A, H]   fused head weight^T   [Wmu^T ; Wsg^T]
    b12_ref  : [H, 2]    packed bias columns   [b1 | b2]
    bh_ref   : [2A, 1]   packed head bias      [bmu ; bsg]
    noise_ref: [A, 1]    noise column, broadcast over batch lanes
    tau_ref  : [1, 1]    temperature scalar (SMEM)
    out_ref  : [A, TB]   sampled action tile (feature-major, lane-dense)
    """
    A = out_ref.shape[0]
    tau = tau_ref[0, 0]
    mm_dtype = w1_ref.dtype  # bf16 or f32 matmul operands; accumulation is f32.

    x = x_ref[...].astype(mm_dtype)                                  # [TB, D]
    b12 = b12_ref[...]                                               # [H, 2]

    # h1^T = W1^T @ x^T  computed by contracting D of both operands.
    h1 = lax.dot_general(w1_ref[...], x, (((1,), (1,)), ((), ())),
                         preferred_element_type=jnp.float32)         # [H, TB]
    h1 = jnp.maximum(h1 + b12[:, 0:1], 0.0)

    h2 = jnp.dot(w2_ref[...], h1.astype(mm_dtype),
                 preferred_element_type=jnp.float32)                 # [H, TB]
    h2 = jnp.maximum(h2 + b12[:, 1:2], 0.0)

    # Fused head: rows [:A] -> mu head, rows [A:] -> sigma head (sublane slices).
    y = jnp.dot(wh_ref[...], h2.astype(mm_dtype),
                preferred_element_type=jnp.float32) + bh_ref[...]    # [2A, TB]

    mu = jnp.tanh(y[:A, :])
    sg_pre = y[A:, :]
    # Numerically-stable softplus: max(x,0) + log1p(exp(-|x|))
    sigma = jnp.maximum(sg_pre, 0.0) + jnp.log1p(jnp.exp(-jnp.abs(sg_pre)))

    out_ref[...] = mu + noise_ref[...] * (sigma + tau)


def _round_up(n, m):
    return ((n + m - 1) // m) * m


def prepare_params(params, matmul_dtype=jnp.float32):
    """One-time packing of parameters (hoisted out of the per-call hot path)."""
    w1T = jnp.asarray(params["w1"]).T.astype(matmul_dtype)                     # [H, D]
    w2T = jnp.asarray(params["w2"]).T.astype(matmul_dtype)                     # [H, H]
    whT = jnp.concatenate([params["wmu"], params["wsg"]],
                          axis=1).T.astype(matmul_dtype)                       # [2A, H]
    b12c = jnp.stack([params["b1"], params["b2"]], axis=1).astype(jnp.float32)  # [H, 2]
    bhc = jnp.concatenate([params["bmu"],
                           params["bsg"]])[:, None].astype(jnp.float32)        # [2A, 1]
    return dict(w1T=w1T, w2T=w2T, whT=whT, b12c=b12c, bhc=bhc)


def policy_stochastic_forward(x, packed, noise, tau):
    """x: [B, D] f32; noise: [A] f32 (shared across batch); returns [B, A] f32."""
    B, D = x.shape
    H = packed["w1T"].shape[0]
    A = packed["bhc"].shape[0] // 2

    # ---- batch tiling: batch lives on the lane axis of the output ----
    B_pad = _round_up(B, 128)
    if B_pad >= 256:
        # Large tiles to amortize per-step cost, but keep >=2 steps so both
        # v7x TensorCores get work via dimension_semantics=("parallel",).
        TB = min(1024, _round_up(B_pad // 2, 128))
    else:
        TB = 128
    B_pad = _round_up(B_pad, TB)
    if B_pad != B:
        x = jnp.pad(x, ((0, B_pad - B), (0, 0)))

    # Per-call small operands: noise column + tau scalar only.
    noise_c = noise.astype(jnp.float32).reshape(A, 1)
    tau_arr = jnp.full((1, 1), tau, jnp.float32)

    flops = 2 * B_pad * (D * H + H * H + H * 2 * A)
    transcendentals = 3 * A * B_pad  # tanh + exp + log1p per action element
    bytes_accessed = (B_pad * D * 4 + B_pad * A * 4 +
                      sum(int(v.size) * v.dtype.itemsize for v in packed.values()))

    vmem = pltpu.MemorySpace.VMEM
    smem = pltpu.MemorySpace.SMEM

    out_fm = pl.pallas_call(
        _policy_kernel,
        out_shape=jax.ShapeDtypeStruct((A, B_pad), jnp.float32),
        grid=(B_pad // TB,),
        in_specs=[
            pl.BlockSpec((TB, D), lambda i: (i, 0), memory_space=vmem),      # x tile
            pl.BlockSpec((H, D), lambda i: (0, 0), memory_space=vmem),       # W1^T
            pl.BlockSpec((H, H), lambda i: (0, 0), memory_space=vmem),       # W2^T
            pl.BlockSpec((2 * A, H), lambda i: (0, 0), memory_space=vmem),   # fused head^T
            pl.BlockSpec((H, 2), lambda i: (0, 0), memory_space=vmem),       # b1|b2 cols
            pl.BlockSpec((2 * A, 1), lambda i: (0, 0), memory_space=vmem),   # bmu;bsg col
            pl.BlockSpec((A, 1), lambda i: (0, 0), memory_space=vmem),       # noise col
            pl.BlockSpec((1, 1), lambda i: (0, 0), memory_space=smem),       # tau scalar
        ],
        out_specs=pl.BlockSpec((A, TB), lambda i: (0, i), memory_space=vmem),
        compiler_params=pltpu.CompilerParams(
            dimension_semantics=("parallel",)),
        cost_estimate=pl.CostEstimate(flops=flops,
                                      transcendentals=transcendentals,
                                      bytes_accessed=bytes_accessed),
    )(x, packed["w1T"], packed["w2T"], packed["whT"], packed["b12c"],
      packed["bhc"], noise_c, tau_arr)

    # Back to the module's batch-major [B, A] convention.
    return out_fm[:, :B].T


def init_params(key, x_dim, h_dim, a_dim):
    """Deterministic init mimicking PyTorch Linear's U(-1/sqrt(fan_in), +...)."""
    ks = jax.random.split(key, 8)

    def lin(kw, kb, fan_in, fan_out):
        bound = 1.0 / jnp.sqrt(fan_in)
        w = jax.random.uniform(kw, (fan_in, fan_out), jnp.float32, -bound, bound)
        b = jax.random.uniform(kb, (fan_out,), jnp.float32, -bound, bound)
        return w, b

    w1, b1 = lin(ks[0], ks[1], x_dim, h_dim)
    w2, b2 = lin(ks[2], ks[3], h_dim, h_dim)
    wmu, bmu = lin(ks[4], ks[5], h_dim, a_dim)
    wsg, bsg = lin(ks[6], ks[7], h_dim, a_dim)
    return dict(w1=w1, b1=b1, w2=w2, b2=b2, wmu=wmu, bmu=bmu, wsg=wsg, bsg=bsg)


def _reference(x, params, noise, tau):
    h1 = jnp.maximum(x @ params["w1"] + params["b1"], 0.0)
    h2 = jnp.maximum(h1 @ params["w2"] + params["b2"], 0.0)
    mu = jnp.tanh(h2 @ params["wmu"] + params["bmu"])
    sigma = jax.nn.softplus(h2 @ params["wsg"] + params["bsg"])
    return mu + noise[None, :] * (sigma + tau)


if __name__ == "__main__":
    # Module config consistent with the 1-D branch: x_dim=(32,), a_dim=(8,),
    # policy_h_dim=32, policy_tau=0.1.
    D, H, A = 32, 32, 8
    tau = 0.1

    key = jax.random.PRNGKey(0)
    k_params, k_x, k_noise, k_x2 = jax.random.split(key, 4)

    params = init_params(k_params, D, H, A)
    noise = jax.random.normal(k_noise, (A,), jnp.float32)

    # One-time packing (hoisted out of the per-call path).
    packed_f32 = prepare_params(params, jnp.float32)
    packed_bf16 = prepare_params(params, jnp.bfloat16)

    # --- 1) small batch, f32 matmuls, strict check ---
    B = 2
    x = jax.random.normal(k_x, (B, D), jnp.float32)
    out = jax.block_until_ready(policy_stochastic_forward(x, packed_f32, noise, tau))
    ref = _reference(x, params, noise, tau)
    assert out.shape == (B, A)
    assert jnp.allclose(out, ref, atol=1e-5, rtol=1e-5), float(jnp.max(jnp.abs(out - ref)))

    # --- 2) larger batch (exercises padding + multi-step parallel grid), f32 ---
    B2 = 300
    x2 = jax.random.normal(k_x2, (B2, D), jnp.float32)
    out2 = jax.block_until_ready(policy_stochastic_forward(x2, packed_f32, noise, tau))
    ref2 = _reference(x2, params, noise, tau)
    assert out2.shape == (B2, A)
    assert jnp.allclose(out2, ref2, atol=1e-5, rtol=1e-5), float(jnp.max(jnp.abs(out2 - ref2)))

    # --- 3) bf16 MXU operands (v6e/v7x recommendation), f32 accumulation ---
    out3 = jax.block_until_ready(policy_stochastic_forward(x, packed_bf16, noise, tau))
    assert out3.shape == (B, A)
    assert jnp.allclose(out3, ref, atol=5e-2, rtol=5e-2), float(jnp.max(jnp.abs(out3 - ref)))

    print("KERNEL_OK")
</pallas_src>

<mosaic_0001>
module attributes {stable_mosaic.version = 11 : i64} {
  func.func @_policy_kernel(%arg0: i32, %arg1: memref<128x32xf32, #tpu.memory_space<vmem>>, %arg2: memref<32x32xf32, #tpu.memory_space<vmem>>, %arg3: memref<32x32xf32, #tpu.memory_space<vmem>>, %arg4: memref<16x32xf32, #tpu.memory_space<vmem>>, %arg5: memref<32x2xf32, #tpu.memory_space<vmem>>, %arg6: memref<16x1xf32, #tpu.memory_space<vmem>>, %arg7: memref<8x1xf32, #tpu.memory_space<vmem>>, %arg8: memref<1x1xf32, #tpu.memory_space<smem>>, %arg9: memref<8x128xf32, #tpu.memory_space<vmem>>) attributes {dimension_semantics = [#tpu.dimension_semantics<parallel>], iteration_bounds = array<i64: 1>, scalar_prefetch = 0 : i64, scratch_operands = 0 : i64, tpu.core_type = #tpu.core_type<tc>, window_params = [{transform_indices = @transform_0, window_bounds = array<i64: 128, 32>}, {pipeline_mode = #tpu.pipeline_mode<synchronous>, transform_indices = @transform_1, window_bounds = array<i64: 32, 32>}, {pipeline_mode = #tpu.pipeline_mode<synchronous>, transform_indices = @transform_2, window_bounds = array<i64: 32, 32>}, {pipeline_mode = #tpu.pipeline_mode<synchronous>, transform_indices = @transform_3, window_bounds = array<i64: 16, 32>}, {pipeline_mode = #tpu.pipeline_mode<synchronous>, transform_indices = @transform_4, window_bounds = array<i64: 32, 2>}, {pipeline_mode = #tpu.pipeline_mode<synchronous>, transform_indices = @transform_5, window_bounds = array<i64: 16, 1>}, {pipeline_mode = #tpu.pipeline_mode<synchronous>, transform_indices = @transform_6, window_bounds = array<i64: 8, 1>}, {transform_indices = @transform_7, window_bounds = array<i64: 1, 1>}, {transform_indices = @transform_8, window_bounds = array<i64: 8, 128>}]} {
    %c0 = arith.constant 0 : index
    %c0_0 = arith.constant 0 : index
    %0 = memref.load %arg8[%c0, %c0_0] : memref<1x1xf32, #tpu.memory_space<smem>>
    %c0_1 = arith.constant 0 : index
    %c0_2 = arith.constant 0 : index
    %1 = vector.load %arg1[%c0_1, %c0_2] : memref<128x32xf32, #tpu.memory_space<vmem>>, vector<128x32xf32>
    %c0_3 = arith.constant 0 : index
    %c0_4 = arith.constant 0 : index
    %2 = vector.load %arg5[%c0_3, %c0_4] : memref<32x2xf32, #tpu.memory_space<vmem>>, vector<32x2xf32>
    %c0_5 = arith.constant 0 : index
    %c0_6 = arith.constant 0 : index
    %3 = vector.load %arg2[%c0_5, %c0_6] : memref<32x32xf32, #tpu.memory_space<vmem>>, vector<32x32xf32>
    %cst = arith.constant dense<0.000000e+00> : vector<32x128xf32>
    %4 = tpu.matmul %3, %1, %cst {dimension_numbers = #tpu.dot_dimension_numbers<[1], [1], [0], [0], [0, 0, 1, 0], [], []>} : vector<32x32xf32>, vector<128x32xf32>, vector<32x128xf32> -> vector<32x128xf32>
    %5 = vector.extract_strided_slice %2 {offsets = [0, 0], sizes = [32, 1], strides = [1, 1]} : vector<32x2xf32> to vector<32x1xf32>
    %6 = vector.broadcast %5 : vector<32x1xf32> to vector<32x128xf32>
    %7 = arith.addf %4, %6 : vector<32x128xf32>
    %cst_7 = arith.constant 0.000000e+00 : f32
    %8 = vector.broadcast %cst_7 : f32 to vector<32x128xf32>
    %9 = arith.maximumf %7, %8 : vector<32x128xf32>
    %c0_8 = arith.constant 0 : index
    %c0_9 = arith.constant 0 : index
    %10 = vector.load %arg3[%c0_8, %c0_9] : memref<32x32xf32, #tpu.memory_space<vmem>>, vector<32x32xf32>
    %cst_10 = arith.constant dense<0.000000e+00> : vector<32x128xf32>
    %11 = tpu.matmul %10, %9, %cst_10 {dimension_numbers = #tpu.dot_dimension_numbers<[1], [0], [0], [1], [0, 0, 1, 1], [], []>} : vector<32x32xf32>, vector<32x128xf32>, vector<32x128xf32> -> vector<32x128xf32>
    %12 = vector.extract_strided_slice %2 {offsets = [0, 1], sizes = [32, 1], strides = [1, 1]} : vector<32x2xf32> to vector<32x1xf32>
    %13 = vector.broadcast %12 : vector<32x1xf32> to vector<32x128xf32>
    %14 = arith.addf %11, %13 : vector<32x128xf32>
    %cst_11 = arith.constant 0.000000e+00 : f32
    %15 = vector.broadcast %cst_11 : f32 to vector<32x128xf32>
    %16 = arith.maximumf %14, %15 : vector<32x128xf32>
    %c0_12 = arith.constant 0 : index
    %c0_13 = arith.constant 0 : index
    %17 = vector.load %arg4[%c0_12, %c0_13] : memref<16x32xf32, #tpu.memory_space<vmem>>, vector<16x32xf32>
    %cst_14 = arith.constant dense<0.000000e+00> : vector<16x128xf32>
    %18 = tpu.matmul %17, %16, %cst_14 {dimension_numbers = #tpu.dot_dimension_numbers<[1], [0], [0], [1], [0, 0, 1, 1], [], []>} : vector<16x32xf32>, vector<32x128xf32>, vector<16x128xf32> -> vector<16x128xf32>
    %c0_15 = arith.constant 0 : index
    %c0_16 = arith.constant 0 : index
    %19 = vector.load %arg6[%c0_15, %c0_16] : memref<16x1xf32, #tpu.memory_space<vmem>>, vector<16x1xf32>
    %20 = vector.broadcast %19 : vector<16x1xf32> to vector<16x128xf32>
    %21 = arith.addf %18, %20 : vector<16x128xf32>
    %22 = vector.extract_strided_slice %21 {offsets = [0, 0], sizes = [8, 128], strides = [1, 1]} : vector<16x128xf32> to vector<8x128xf32>
    %23 = math.tanh %22 : vector<8x128xf32>
    %24 = vector.extract_strided_slice %21 {offsets = [8, 0], sizes = [8, 128], strides = [1, 1]} : vector<16x128xf32> to vector<8x128xf32>
    %cst_17 = arith.constant 0.000000e+00 : f32
    %25 = vector.broadcast %cst_17 : f32 to vector<8x128xf32>
    %26 = arith.maximumf %24, %25 : vector<8x128xf32>
    %27 = math.absf %24 : vector<8x128xf32>
    %cst_18 = arith.constant 0.000000e+00 : f32
    %28 = vector.broadcast %cst_18 : f32 to vector<8x128xf32>
    %29 = arith.subf %28, %27 : vector<8x128xf32>
    %30 = math.exp %29 : vector<8x128xf32>
    %31 = math.log1p %30 : vector<8x128xf32>
    %32 = arith.addf %26, %31 : vector<8x128xf32>
    %c0_19 = arith.constant 0 : index
    %c0_20 = arith.constant 0 : index
    %33 = vector.load %arg7[%c0_19, %c0_20] : memref<8x1xf32, #tpu.memory_space<vmem>>, vector<8x1xf32>
    %34 = vector.broadcast %0 : f32 to vector<8x128xf32>
    %35 = arith.addf %32, %34 : vector<8x128xf32>
    %36 = vector.broadcast %33 : vector<8x1xf32> to vector<8x128xf32>
    %37 = arith.mulf %36, %35 : vector<8x128xf32>
    %38 = arith.addf %23, %37 : vector<8x128xf32>
    %c0_21 = arith.constant 0 : index
    %c0_22 = arith.constant 0 : index
    %39 = vector.load %arg9[%c0_21, %c0_22] : memref<8x128xf32, #tpu.memory_space<vmem>>, vector<8x128xf32>
    tpu.vector_store %arg9[%c0_21, %c0_22], %38 {strides = array<i32>} : memref<8x128xf32, #tpu.memory_space<vmem>>, vector<8x128xf32>,
    return
  }
  func.func @transform_0(%arg0: i32) -> (i32, i32) {
    %c0_i32 = arith.constant 0 : i32
    %c0_i32_0 = arith.constant 0 : i32
    return %arg0, %c0_i32 : i32, i32
  }
  func.func @transform_1(%arg0: i32) -> (i32, i32) {
    %c0_i32 = arith.constant 0 : i32
    %c0_i32_0 = arith.constant 0 : i32
    %c0_i32_1 = arith.constant 0 : i32
    return %c0_i32, %c0_i32_0 : i32, i32
  }
  func.func @transform_2(%arg0: i32) -> (i32, i32) {
    %c0_i32 = arith.constant 0 : i32
    %c0_i32_0 = arith.constant 0 : i32
    %c0_i32_1 = arith.constant 0 : i32
    return %c0_i32, %c0_i32_0 : i32, i32
  }
  func.func @transform_3(%arg0: i32) -> (i32, i32) {
    %c0_i32 = arith.constant 0 : i32
    %c0_i32_0 = arith.constant 0 : i32
    %c0_i32_1 = arith.constant 0 : i32
    return %c0_i32, %c0_i32_0 : i32, i32
  }
  func.func @transform_4(%arg0: i32) -> (i32, i32) {
    %c0_i32 = arith.constant 0 : i32
    %c0_i32_0 = arith.constant 0 : i32
    %c0_i32_1 = arith.constant 0 : i32
    return %c0_i32, %c0_i32_0 : i32, i32
  }
  func.func @transform_5(%arg0: i32) -> (i32, i32) {
    %c0_i32 = arith.constant 0 : i32
    %c0_i32_0 = arith.constant 0 : i32
    %c0_i32_1 = arith.constant 0 : i32
    return %c0_i32, %c0_i32_0 : i32, i32
  }
  func.func @transform_6(%arg0: i32) -> (i32, i32) {
    %c0_i32 = arith.constant 0 : i32
    %c0_i32_0 = arith.constant 0 : i32
    %c0_i32_1 = arith.constant 0 : i32
    return %c0_i32, %c0_i32_0 : i32, i32
  }
  func.func @transform_7(%arg0: i32) -> (i32, i32) {
    %c0_i32 = arith.constant 0 : i32
    %c0_i32_0 = arith.constant 0 : i32
    %c0_i32_1 = arith.constant 0 : i32
    return %c0_i32, %c0_i32_0 : i32, i32
  }
  func.func @transform_8(%arg0: i32) -> (i32, i32) {
    %c0_i32 = arith.constant 0 : i32
    %c0_i32_0 = arith.constant 0 : i32
    return %c0_i32, %arg0 : i32, i32
  }
}

</mosaic_0001>

<llo_original>
// kernel: tpu_custom_call.1
$region0: #{tpu_custom_call.1}
  #allocation0 [shape = 'u32[]', space=smem, size = 0x4, offset = 0x4, fixed_abs, tag = 'smem constant byte address 0x4 - core index']
  #allocation1 [shape = 'u32[144,128]{1,0:T(1,128)}', space=vmem, size = 0x12000, scoped, tag = 'internal scratch']
  #allocation2 [shape = 'f32[1,1]{1,0:T(1,128)S(6)}', space=smem, size = 0x200, scoped, tag = 'scoped memory for tpu_custom_call.1']
  %s0 = inlined_call_operand.vmem [shape: f32[128,32], index: 0, kind: input, shape index: {}]
  %s1 = inlined_call_operand.vmem [shape: f32[32,32], index: 1, kind: input, shape index: {}]
  %s2 = inlined_call_operand.vmem [shape: f32[32,32], index: 2, kind: input, shape index: {}]
  %s3 = inlined_call_operand.vmem [shape: f32[16,32], index: 3, kind: input, shape index: {}]
  %s4 = inlined_call_operand.vmem [shape: f32[32,2], index: 4, kind: input, shape index: {}]
  %s5 = inlined_call_operand.vmem [shape: f32[16,1], index: 5, kind: input, shape index: {}]
  %s6 = inlined_call_operand.vmem [shape: f32[8,1], index: 6, kind: input, shape index: {}]
  %s7 = inlined_call_operand.<no memory space> [shape: f32[1,1], index: 7, kind: input, shape index: {}]
  %s8 = inlined_call_operand.hbm [shape: f32[8,128], index: 8, kind: output, shape index: {}]
  %s9 = sld [smem:[#allocation0]]
  $region42: #{tpu_custom_call.1} parent=0
    _
  %s11 = ssub.s32 1, %s9
  %s12 = scalar_select 0, %s11, %s9
  %13 = sst [smem:[#allocation2]] %s7
  $region1: #{tpu_custom_call.1} parent=0
    #allocation3 [shape = 'u8[4096]{0}', space=vmem, size = 0x1000, scoped, tag = 'output window, operand 0, single buffered']
    #allocation4 [shape = 's32[1]{0}', space=sflag, size = 0x4, scoped, tag = 'scoped memory for tpu_custom_call.1']
    %14 = vsyncpa [#allocation4], 0
    // Predicated region
    $region2: #{tpu_custom_call.1} parent=1 // pred_check
      _
    $region3: #{tpu_custom_call.1} parent=1 // pred_check_branch
      %16 = sbr.rel (0) target = $region5
    $region4: #{tpu_custom_call.1} parent=1 // pred_region
      _
    $region5: #{tpu_custom_call.1} parent=1 // pred_fallthru
      _
    // Predicated region
    $region6: #{tpu_custom_call.1} parent=1 // pred_check
      _
    $region7: #{tpu_custom_call.1} parent=1 // pred_check_branch
      %18 = sbr.rel (0) target = $region9
    $region8: #{tpu_custom_call.1} parent=1 // pred_region
      _
    $region9: #{tpu_custom_call.1} parent=1 // pred_fallthru
      _
    // Predicated region
    $region10: #{tpu_custom_call.1} parent=1 // pred_check
      _
    $region11: #{tpu_custom_call.1} parent=1 // pred_check_branch
      %20 = sbr.rel (0) target = $region13
    $region12: #{tpu_custom_call.1} parent=1 // pred_region
      _
    $region13: #{tpu_custom_call.1} parent=1 // pred_fallthru
      _
    // Predicated region
    $region14: #{tpu_custom_call.1} parent=1 // pred_check
      _
    $region15: #{tpu_custom_call.1} parent=1 // pred_check_branch
      %22 = sbr.rel (0) target = $region17
    $region16: #{tpu_custom_call.1} parent=1 // pred_region
      _
    $region17: #{tpu_custom_call.1} parent=1 // pred_fallthru
      _
    // Predicated region
    $region18: #{tpu_custom_call.1} parent=1 // pred_check
      _
    $region19: #{tpu_custom_call.1} parent=1 // pred_check_branch
      %24 = sbr.rel (0) target = $region21
    $region20: #{tpu_custom_call.1} parent=1 // pred_region
      _
    $region21: #{tpu_custom_call.1} parent=1 // pred_fallthru
      _
    // Predicated region
    $region22: #{tpu_custom_call.1} parent=1 // pred_check
      _
    $region23: #{tpu_custom_call.1} parent=1 // pred_check_branch
      %26 = sbr.rel (0) target = $region25
    $region24: #{tpu_custom_call.1} parent=1 // pred_region
      _
    $region25: #{tpu_custom_call.1} parent=1 // pred_fallthru
      _
    // Predicated region
    $region26: #{tpu_custom_call.1} parent=1 // pred_check
      _
    $region27: #{tpu_custom_call.1} parent=1 // pred_check_branch
      %28 = sbr.rel (0) target = $region29
    $region28: #{tpu_custom_call.1} parent=1 // pred_region
      _
    $region29: #{tpu_custom_call.1} parent=1 // pred_fallthru
      _
    // Predicated region
    $region30: #{tpu_custom_call.1} parent=1 // pred_check
      _
    $region31: #{tpu_custom_call.1} parent=1 // pred_check_branch
      %30 = sbr.rel (0) target = $region33
    $region32: #{tpu_custom_call.1} parent=1 // pred_region
      _
    $region33: #{tpu_custom_call.1} parent=1 // pred_fallthru
      _
    %s31 = sld [smem:[#allocation2]]
    %v32 = vld [vmem:[%s0] sm:$0xff]
    %v33 = vld [vmem:[%s0 + $0x8] sm:$0xff]
    %v34 = vld [vmem:[%s0 + $0x10] sm:$0xff]
    %v35 = vld [vmem:[%s0 + $0x18] sm:$0xff]
    %v36 = vld [vmem:[%s0 + $0x20] sm:$0xff]
    %v37 = vld [vmem:[%s0 + $0x28] sm:$0xff]
    %v38 = vld [vmem:[%s0 + $0x30] sm:$0xff]
    %v39 = vld [vmem:[%s0 + $0x38] sm:$0xff]
    %v40 = vld [vmem:[%s0 + $0x40] sm:$0xff]
    %v41 = vld [vmem:[%s0 + $0x48] sm:$0xff]
    %v42 = vld [vmem:[%s0 + $0x50] sm:$0xff]
    %v43 = vld [vmem:[%s0 + $0x58] sm:$0xff]
    %v44 = vld [vmem:[%s0 + $0x60] sm:$0xff]
    %v45 = vld [vmem:[%s0 + $0x68] sm:$0xff]
    %v46 = vld [vmem:[%s0 + $0x70] sm:$0xff]
    %v47 = vld [vmem:[%s0 + $0x78] sm:$0xff]
    %v48 = vld [vmem:[%s4] sm:$0xff]
    %v49 = vld [vmem:[%s4 + $0x8] sm:$0xff]
    %v50 = vld [vmem:[%s4 + $0x10] sm:$0xff]
    %v51 = vld [vmem:[%s4 + $0x18] sm:$0xff]
    %v52 = vld [vmem:[%s1] sm:$0xff]
    %v53 = vld [vmem:[%s1 + $0x8] sm:$0xff]
    %v54 = vld [vmem:[%s1 + $0x10] sm:$0xff]
    %v55 = vld [vmem:[%s1 + $0x18] sm:$0xff]
    %57 = vset.pattern.permute.xlu0 0
    %58 = vperm.xlu0 %57, %v48
    %v59 = vpop.permute.xlu0 %58
    %62 = vset.pattern.permute.xlu0 0
    %63 = vperm.xlu0 %62, %v49
    %v64 = vpop.permute.xlu0 %63
    %67 = vset.pattern.permute.xlu0 0
    %68 = vperm.xlu0 %67, %v50
    %v69 = vpop.permute.xlu0 %68
    %72 = vset.pattern.permute.xlu0 0
    %73 = vperm.xlu0 %72, %v51
    %v74 = vpop.permute.xlu0 %73
    %vm76 = vcmask 261120
    %v78 = vsel %vm76, %v52, 0
    %v81 = vsel %vm76, %v53, 0
    %v84 = vsel %vm76, %v54, 0
    %v87 = vsel %vm76, %v55, 0
    %v90 = vsel %vm76, %v32, 0
    %v93 = vsel %vm76, %v33, 0
    %v96 = vsel %vm76, %v34, 0
    %v99 = vsel %vm76, %v35, 0
    %v102 = vsel %vm76, %v36, 0
    %v105 = vsel %vm76, %v37, 0
    %v108 = vsel %vm76, %v38, 0
    %v111 = vsel %vm76, %v39, 0
    %v114 = vsel %vm76, %v40, 0
    %v117 = vsel %vm76, %v41, 0
    %v120 = vsel %vm76, %v42, 0
    %v123 = vsel %vm76, %v43, 0
    %v126 = vsel %vm76, %v44, 0
    %v129 = vsel %vm76, %v45, 0
    %v132 = vsel %vm76, %v46, 0
    %v135 = vsel %vm76, %v47, 0
    %137 = vmatprep.subr.mxu0 0.0
    %138 = vmatpush1.xpose.msra.mxu0 %v90
    %139 = vmatprep.subr.mxu0 0.0
    %140 = vmatpush1.xpose.msra.mxu0 %v93
    %141 = vmatprep.subr.mxu0 0.0
    %142 = vmatpush1.xpose.msra.mxu0 %v96
    %143 = vmatprep.subr.mxu0 0.0
    %144 = vmatpush1.xpose.msra.mxu0 %v99
    %145 = vmatprep.subr.mxu0 0.0
    %146 = vmatpush1.xpose.msra.mxu0 %v102
    %147 = vmatprep.subr.mxu0 0.0
    %148 = vmatpush1.xpose.msra.mxu0 %v105
    %149 = vmatprep.subr.mxu0 0.0
    %150 = vmatpush1.xpose.msra.mxu0 %v108
    %151 = vmatprep.subr.mxu0 0.0
    %152 = vmatpush1.xpose.msra.mxu0 %v111
    %153 = vmatprep.subr.mxu0 0.0
    %154 = vmatpush1.xpose.msra.mxu0 %v114
    %155 = vmatprep.subr.mxu0 0.0
    %156 = vmatpush1.xpose.msra.mxu0 %v117
    %157 = vmatprep.subr.mxu0 0.0
    %158 = vmatpush1.xpose.msra.mxu0 %v120
    %159 = vmatprep.subr.mxu0 0.0
    %160 = vmatpush1.xpose.msra.mxu0 %v123
    %161 = vmatprep.subr.mxu0 0.0
    %162 = vmatpush1.xpose.msra.mxu0 %v126
    %163 = vmatprep.subr.mxu0 0.0
    %164 = vmatpush1.xpose.msra.mxu0 %v129
    %165 = vmatprep.subr.mxu0 0.0
    %166 = vmatpush1.xpose.msra.mxu0 %v132
    %167 = vmatprep.subr.mxu0 0.0
    %168 = vmatpush1.xpose.msra.mxu0 %v135
    %169 = vmatprep.subr.mxu0 0.0
    %170 = vmatpush1.xpose.msra.mxu0 0.0
    %171 = vmatprep.subr.mxu0 0.0
    %172 = vmatpush1.xpose.msra.mxu0 0.0
    %173 = vmatprep.subr.mxu0 0.0
    %174 = vmatpush1.xpose.msra.mxu0 0.0
    %175 = vmatprep.subr.mxu0 0.0
    %176 = vmatpush1.xpose.msra.mxu0 0.0
    %177 = vmatprep.subr.mxu0 0.0
    %178 = vmatpush1.xpose.msra.mxu0 0.0
    %179 = vmatprep.subr.mxu0 0.0
    %180 = vmatpush1.xpose.msra.mxu0 0.0
    %181 = vmatprep.subr.mxu0 0.0
    %182 = vmatpush1.xpose.msra.mxu0 0.0
    %183 = vmatprep.subr.mxu0 0.0
    %184 = vmatpush1.xpose.msra.mxu0 0.0
    %185 = vmatprep.subr.mxu0 0.0
    %186 = vmatpush1.xpose.msra.mxu0 0.0
    %187 = vmatprep.subr.mxu0 0.0
    %188 = vmatpush1.xpose.msra.mxu0 0.0
    %189 = vmatprep.subr.mxu0 0.0
    %190 = vmatpush1.xpose.msra.mxu0 0.0
    %191 = vmatprep.subr.mxu0 0.0
    %192 = vmatpush1.xpose.msra.mxu0 0.0
    %193 = vmatprep.subr.mxu0 0.0
    %194 = vmatpush1.xpose.msra.mxu0 0.0
    %195 = vmatprep.subr.mxu0 0.0
    %196 = vmatpush1.xpose.msra.mxu0 0.0
    %197 = vmatprep.subr.mxu0 0.0
    %198 = vmatpush1.xpose.msra.mxu0 0.0
    %199 = vmatprep.subr.mxu0 0.0
    %200 = vmatpush1.xpose.msra.mxu0 0.0
    %201 = vmatprep.mubr.f32.mxu0 0.0
    %202 = vmatmul.mubr.f32.gmra.mrb[0].mxu0 %v78
    %v203 = vpop.f32.mrb[0].mxu0
    %v204 = vadd.f32 %v59, %v203
    %v205 = vpop.f32.mrb[0].mxu0
    %206 = vmatprep.mubr.f32.mxu0 0.0
    %207 = vmatmul.mubr.f32.gmra.mrb[0].mxu0 %v81
    %v208 = vpop.f32.mrb[0].mxu0
    %v209 = vadd.f32 %v64, %v208
    %v210 = vpop.f32.mrb[0].mxu0
    %211 = vmatprep.mubr.f32.mxu0 0.0
    %212 = vmatmul.mubr.f32.gmra.mrb[0].mxu0 %v84
    %v213 = vpop.f32.mrb[0].mxu0
    %v214 = vadd.f32 %v69, %v213
    %v215 = vpop.f32.mrb[0].mxu0
    %216 = vmatprep.mubr.f32.mxu0 0.0
    %217 = vmatmul.mubr.f32.gmra.mrb[0].mxu0 %v87
    %v218 = vpop.f32.mrb[0].mxu0
    %v219 = vadd.f32 %v74, %v218
    %v220 = vpop.f32.mrb[0].mxu0
    %221 = vdwg.mxu0
    %v222 = vmax.f32 %v204, 0.0
    %v223 = vmax.f32 %v209, 0.0
    %v224 = vmax.f32 %v214, 0.0
    %v225 = vmax.f32 %v219, 0.0
    %v226 = vld [vmem:[%s2] sm:$0xff]
    %v227 = vld [vmem:[%s2 + $0x8] sm:$0xff]
    %v228 = vld [vmem:[%s2 + $0x10] sm:$0xff]
    %v229 = vld [vmem:[%s2 + $0x18] sm:$0xff]
    %230 = vset.pattern.permute.xlu0 1
    %231 = vperm.xlu0 %230, %v48
    %v232 = vpop.permute.xlu0 %231
    %234 = vset.pattern.permute.xlu0 1
    %235 = vperm.xlu0 %234, %v49
    %v236 = vpop.permute.xlu0 %235
    %238 = vset.pattern.permute.xlu0 1
    %239 = vperm.xlu0 %238, %v50
    %v240 = vpop.permute.xlu0 %239
    %242 = vset.pattern.permute.xlu0 1
    %243 = vperm.xlu0 %242, %v51
    %v244 = vpop.permute.xlu0 %243
    %v247 = vsel %vm76, %v226, 0
    %v250 = vsel %vm76, %v227, 0
    %v253 = vsel %vm76, %v228, 0
    %v256 = vsel %vm76, %v229, 0
    %258 = vmatprep.subr.mxu0 0.0
    %259 = vmatpush1.msra.mxu0 %v222
    %260 = vmatprep.subr.mxu0 0.0
    %261 = vmatpush1.msra.mxu0 %v223
    %262 = vmatprep.subr.mxu0 0.0
    %263 = vmatpush1.msra.mxu0 %v224
    %264 = vmatprep.subr.mxu0 0.0
    %265 = vmatpush1.msra.mxu0 %v225
    %266 = vmatprep.subr.mxu0 0.0
    %267 = vmatpush1.msra.mxu0 0.0
    %268 = vmatprep.subr.mxu0 0.0
    %269 = vmatpush1.msra.mxu0 0.0
    %270 = vmatprep.subr.mxu0 0.0
    %271 = vmatpush1.msra.mxu0 0.0
    %272 = vmatprep.subr.mxu0 0.0
    %273 = vmatpush1.msra.mxu0 0.0
    %274 = vmatprep.subr.mxu0 0.0
    %275 = vmatpush1.msra.mxu0 0.0
    %276 = vmatprep.subr.mxu0 0.0
    %277 = vmatpush1.msra.mxu0 0.0
    %278 = vmatprep.subr.mxu0 0.0
    %279 = vmatpush1.msra.mxu0 0.0
    %280 = vmatprep.subr.mxu0 0.0
    %281 = vmatpush1.msra.mxu0 0.0
    %282 = vmatprep.subr.mxu0 0.0
    %283 = vmatpush1.msra.mxu0 0.0
    %284 = vmatprep.subr.mxu0 0.0
    %285 = vmatpush1.msra.mxu0 0.0
    %286 = vmatprep.subr.mxu0 0.0
    %287 = vmatpush1.msra.mxu0 0.0
    %288 = vmatprep.subr.mxu0 0.0
    %289 = vmatpush1.msra.mxu0 0.0
    %290 = vmatprep.subr.mxu0 0.0
    %291 = vmatpush1.msra.mxu0 0.0
    %292 = vmatprep.subr.mxu0 0.0
    %293 = vmatpush1.msra.mxu0 0.0
    %294 = vmatprep.subr.mxu0 0.0
    %295 = vmatpush1.msra.mxu0 0.0
    %296 = vmatprep.subr.mxu0 0.0
    %297 = vmatpush1.msra.mxu0 0.0
    %298 = vmatprep.subr.mxu0 0.0
    %299 = vmatpush1.msra.mxu0 0.0
    %300 = vmatprep.subr.mxu0 0.0
    %301 = vmatpush1.msra.mxu0 0.0
    %302 = vmatprep.subr.mxu0 0.0
    %303 = vmatpush1.msra.mxu0 0.0
    %304 = vmatprep.subr.mxu0 0.0
    %305 = vmatpush1.msra.mxu0 0.0
    %306 = vmatprep.subr.mxu0 0.0
    %307 = vmatpush1.msra.mxu0 0.0
    %308 = vmatprep.subr.mxu0 0.0
    %309 = vmatpush1.msra.mxu0 0.0
    %310 = vmatprep.subr.mxu0 0.0
    %311 = vmatpush1.msra.mxu0 0.0
    %312 = vmatprep.subr.mxu0 0.0
    %313 = vmatpush1.msra.mxu0 0.0
    %314 = vmatprep.subr.mxu0 0.0
    %315 = vmatpush1.msra.mxu0 0.0
    %316 = vmatprep.subr.mxu0 0.0
    %317 = vmatpush1.msra.mxu0 0.0
    %318 = vmatprep.subr.mxu0 0.0
    %319 = vmatpush1.msra.mxu0 0.0
    %320 = vmatprep.subr.mxu0 0.0
    %321 = vmatpush1.msra.mxu0 0.0
    %322 = vmatprep.mubr.f32.mxu0 0.0
    %323 = vmatmul.mubr.f32.gmra.mrb[0].mxu0 %v247
    %v324 = vpop.f32.mrb[0].mxu0
    %v325 = vadd.f32 %v232, %v324
    %v326 = vpop.f32.mrb[0].mxu0
    %327 = vmatprep.mubr.f32.mxu0 0.0
    %328 = vmatmul.mubr.f32.gmra.mrb[0].mxu0 %v250
    %v329 = vpop.f32.mrb[0].mxu0
    %v330 = vadd.f32 %v236, %v329
    %v331 = vpop.f32.mrb[0].mxu0
    %332 = vmatprep.mubr.f32.mxu0 0.0
    %333 = vmatmul.mubr.f32.gmra.mrb[0].mxu0 %v253
    %v334 = vpop.f32.mrb[0].mxu0
    %v335 = vadd.f32 %v240, %v334
    %v336 = vpop.f32.mrb[0].mxu0
    %337 = vmatprep.mubr.f32.mxu0 0.0
    %338 = vmatmul.mubr.f32.gmra.mrb[0].mxu0 %v256
    %v339 = vpop.f32.mrb[0].mxu0
    %v340 = vadd.f32 %v244, %v339
    %v341 = vpop.f32.mrb[0].mxu0
    %342 = vdwg.mxu0
    %v343 = vmax.f32 %v325, 0.0
    %v344 = vmax.f32 %v330, 0.0
    %v345 = vmax.f32 %v335, 0.0
    %v346 = vmax.f32 %v340, 0.0
    %v347 = vld [vmem:[%s3] sm:$0xff]
    %v348 = vld [vmem:[%s3 + $0x8] sm:$0xff]
    %v349 = vld [vmem:[%s5] sm:$0xff]
    %v350 = vld [vmem:[%s5 + $0x8] sm:$0xff]
    %352 = vset.pattern.permute.xlu0 0
    %353 = vperm.xlu0 %352, %v349
    %v354 = vpop.permute.xlu0 %353
    %357 = vset.pattern.permute.xlu0 0
    %358 = vperm.xlu0 %357, %v350
    %v359 = vpop.permute.xlu0 %358
    %v362 = vsel %vm76, %v347, 0
    %v365 = vsel %vm76, %v348, 0
    %367 = vmatprep.subr.mxu0 0.0
    %368 = vmatpush1.msra.mxu0 %v343
    %369 = vmatprep.subr.mxu0 0.0
    %370 = vmatpush1.msra.mxu0 %v344
    %371 = vmatprep.subr.mxu0 0.0
    %372 = vmatpush1.msra.mxu0 %v345
    %373 = vmatprep.subr.mxu0 0.0
    %374 = vmatpush1.msra.mxu0 %v346
    %375 = vmatprep.subr.mxu0 0.0
    %376 = vmatpush1.msra.mxu0 0.0
    %377 = vmatprep.subr.mxu0 0.0
    %378 = vmatpush1.msra.mxu0 0.0
    %379 = vmatprep.subr.mxu0 0.0
    %380 = vmatpush1.msra.mxu0 0.0
    %381 = vmatprep.subr.mxu0 0.0
    %382 = vmatpush1.msra.mxu0 0.0
    %383 = vmatprep.subr.mxu0 0.0
    %384 = vmatpush1.msra.mxu0 0.0
    %385 = vmatprep.subr.mxu0 0.0
    %386 = vmatpush1.msra.mxu0 0.0
    %387 = vmatprep.subr.mxu0 0.0
    %388 = vmatpush1.msra.mxu0 0.0
    %389 = vmatprep.subr.mxu0 0.0
    %390 = vmatpush1.msra.mxu0 0.0
    %391 = vmatprep.subr.mxu0 0.0
    %392 = vmatpush1.msra.mxu0 0.0
    %393 = vmatprep.subr.mxu0 0.0
    %394 = vmatpush1.msra.mxu0 0.0
    %395 = vmatprep.subr.mxu0 0.0
    %396 = vmatpush1.msra.mxu0 0.0
    %397 = vmatprep.subr.mxu0 0.0
    %398 = vmatpush1.msra.mxu0 0.0
    %399 = vmatprep.subr.mxu0 0.0
    %400 = vmatpush1.msra.mxu0 0.0
    %401 = vmatprep.subr.mxu0 0.0
    %402 = vmatpush1.msra.mxu0 0.0
    %403 = vmatprep.subr.mxu0 0.0
    %404 = vmatpush1.msra.mxu0 0.0
    %405 = vmatprep.subr.mxu0 0.0
    %406 = vmatpush1.msra.mxu0 0.0
    %407 = vmatprep.subr.mxu0 0.0
    %408 = vmatpush1.msra.mxu0 0.0
    %409 = vmatprep.subr.mxu0 0.0
    %410 = vmatpush1.msra.mxu0 0.0
    %411 = vmatprep.subr.mxu0 0.0
    %412 = vmatpush1.msra.mxu0 0.0
    %413 = vmatprep.subr.mxu0 0.0
    %414 = vmatpush1.msra.mxu0 0.0
    %415 = vmatprep.subr.mxu0 0.0
    %416 = vmatpush1.msra.mxu0 0.0
    %417 = vmatprep.subr.mxu0 0.0
    %418 = vmatpush1.msra.mxu0 0.0
    %419 = vmatprep.subr.mxu0 0.0
    %420 = vmatpush1.msra.mxu0 0.0
    %421 = vmatprep.subr.mxu0 0.0
    %422 = vmatpush1.msra.mxu0 0.0
    %423 = vmatprep.subr.mxu0 0.0
    %424 = vmatpush1.msra.mxu0 0.0
    %425 = vmatprep.subr.mxu0 0.0
    %426 = vmatpush1.msra.mxu0 0.0
    %427 = vmatprep.subr.mxu0 0.0
    %428 = vmatpush1.msra.mxu0 0.0
    %429 = vmatprep.subr.mxu0 0.0
    %430 = vmatpush1.msra.mxu0 0.0
    %431 = vmatprep.mubr.f32.mxu0 0.0
    %432 = vmatmul.mubr.f32.gmra.mrb[0].mxu0 %v362
    %v433 = vpop.f32.mrb[0].mxu0
    %v434 = vadd.f32 %v354, %v433
    %v435 = vpop.f32.mrb[0].mxu0
    %436 = vmatprep.mubr.f32.mxu0 0.0
    %437 = vmatmul.mubr.f32.gmra.mrb[0].mxu0 %v365
    %v438 = vpop.f32.mrb[0].mxu0
    %v439 = vadd.f32 %v359, %v438
    %v440 = vpop.f32.mrb[0].mxu0
    %441 = vdwg.mxu0
    %v442 = vtanh.pop %v434
    %v443 = vmax.f32 %v439, 0.0
    %v444 = vand.u32 2147483647, %v439
    %v445 = vsub.f32 0.0, %v444
    %v446 = vmul.f32 %v445, 1.442695
    %v447 = vpow.pop %v446
    %v448 = vadd.f32 %v447, 1.0
    %v449 = vlog2.pop %v448
    %v450 = vmul.f32 %v449, 0.6931472
    %v451 = vmul.f32 -0.5, %v447
    %v452 = vadd.f32 %v451, 1.0
    %v453 = vmul.f32 %v452, %v447
    %v454 = vand.u32 2147483647, %v447
    %vm455 = vcmp.lt.f32.partialorder %v454, 0.0004427343
    %v456 = vsel %vm455, %v453, %v450
    %v457 = vadd.f32 %v443, %v456
    %v458 = vld [vmem:[%s6] sm:$0xff]
    %v459 = vstv %s31
    %v460 = vadd.f32 %v457, %v459
    %462 = vset.pattern.permute.xlu0 0
    %463 = vperm.xlu0 %462, %v458
    %v464 = vpop.permute.xlu0 %463
    %v466 = vmul.f32 %v464, %v460
    %v467 = vadd.f32 %v442, %v466
    %468 = vst [vmem:[#allocation3] sm:$0xff] %v467
    // Predicated region
    $region34: #{tpu_custom_call.1} parent=1 // pred_check
      _
    $region35: #{tpu_custom_call.1} parent=1 // pred_check_branch
      %470 = sbr.rel (0) target = $region37
    $region36: #{tpu_custom_call.1} parent=1 // pred_region
      %s472 = ssub.s32 128, 128
      %473 = vsyncadd [#allocation4], %s472
      %s475 = sshll.u32 [#allocation3], 4
      %s476 = int_to_ptr.vmem [resolvable:$true] %s475
      %478 = dma.vmem_to_hbm [thread:$0]  %s476, 128, %s8, [#allocation4]
    $region37: #{tpu_custom_call.1} parent=1 // pred_fallthru
      _
    // Predicated region
    $region38: #{tpu_custom_call.1} parent=1 // pred_check
      _
    $region39: #{tpu_custom_call.1} parent=1 // pred_check_branch
      %480 = sbr.rel (0) target = $region41
    $region40: #{tpu_custom_call.1} parent=1 // pred_region
      %481 = dma.done [#allocation4], 128
    $region41: #{tpu_custom_call.1} parent=1 // pred_fallthru
      _
    %482 = vsyncpa [#allocation4], 1

</llo_original>
